<compile_context>
chip_gen: v5e
topology: v5e:2x2
jax: 0.10.0
libtpu: 0.0.40
codegen_flags: <defaults>
</compile_context>

<pallas_src>
import jax
import jax.numpy as jnp
from jax.experimental import pallas as pl
from jax.experimental.pallas import tpu as pltpu

LANE = 128


def _round_up(n, m):
    return ((n + m - 1) // m) * m


def _pad_to(a, shape):
    pads = [(0, t - s) for s, t in zip(a.shape, shape)]
    return jnp.pad(a, pads)


def _make_kernel(compute_dtype):
    def kernel(x_ref, w1_ref, w2_ref, w3_ref, b1_ref, b2_ref, b3_ref, o_ref):
        x = x_ref[...]                                    # (TILE_B, C_in) compute_dtype

        # ---- lin1 + ReLU (f32 accumulate, f32 epilogue) ----
        h = jnp.dot(x, w1_ref[...], preferred_element_type=jnp.float32)
        h = jnp.maximum(h + b1_ref[...], 0.0)             # (TILE_B, Hp) full-vreg

        # ---- lin2 + ReLU ----
        h = jnp.dot(h.astype(compute_dtype), w2_ref[...],
                    preferred_element_type=jnp.float32)
        h = jnp.maximum(h + b2_ref[...], 0.0)

        # ---- lin3 (no activation) ----
        out = jnp.dot(h.astype(compute_dtype), w3_ref[...],
                      preferred_element_type=jnp.float32)
        out = out + b3_ref[...]

        o_ref[...] = out.astype(o_ref.dtype)              # (TILE_B, C_out) store

    return kernel


def discriminator_forward(x, params, *, tile_b=1024, compute_dtype=jnp.float32):
    """Run the 3-layer MLP discriminator as a batch-tiled Pallas kernel.

    x: (B, C_in) float32
    params: dict with w1 (C_in,H), b1 (1,H)/(H,), w2 (H,H), b2, w3 (H,C_out), b3
    returns: (B, C_out) float32
    """
    w1, b1 = params["w1"], params["b1"]
    w2, b2 = params["w2"], params["b2"]
    w3, b3 = params["w3"], params["b3"]

    B, C_in = x.shape
    H = w1.shape[1]
    C_out = w3.shape[1]

    # Hidden dim padded to a full lane width; padding is zeros so the math is
    # unchanged (zero weight rows/cols, zero bias, ReLU(0)=0).
    Hp = _round_up(H, LANE)

    w1_p = _pad_to(w1, (C_in, Hp)).astype(compute_dtype)      # (C_in, Hp)
    w2_p = _pad_to(w2, (Hp, Hp)).astype(compute_dtype)        # (Hp, Hp)
    w3_p = _pad_to(w3, (Hp, C_out)).astype(compute_dtype)     # (Hp, C_out)
    b1_p = _pad_to(b1.reshape(1, -1), (1, Hp)).astype(jnp.float32)
    b2_p = _pad_to(b2.reshape(1, -1), (1, Hp)).astype(jnp.float32)
    b3_p = b3.reshape(1, -1).astype(jnp.float32)               # (1, C_out)

    # Batch tiling: shrink the tile for small batches, pad B to a tile multiple.
    tile_b = max(8, min(tile_b, _round_up(B, 8)))
    B_p = _round_up(B, tile_b)
    x_p = _pad_to(x, (B_p, C_in)).astype(compute_dtype)        # (B_p, C_in)

    grid = (B_p // tile_b,)
    const = lambda i: (0, 0)                                    # resident operands

    out = pl.pallas_call(
        _make_kernel(compute_dtype),
        out_shape=jax.ShapeDtypeStruct((B_p, C_out), jnp.float32),
        grid=grid,
        in_specs=[
            # activations: one batch tile per grid step (auto-pipelined)
            pl.BlockSpec((tile_b, C_in), lambda i: (i, 0)),
            # weights / biases: constant index_map -> DMA'd once, VMEM-resident
            pl.BlockSpec((C_in, Hp), const),
            pl.BlockSpec((Hp, Hp), const),
            pl.BlockSpec((Hp, C_out), const),
            pl.BlockSpec((1, Hp), const),
            pl.BlockSpec((1, Hp), const),
            pl.BlockSpec((1, C_out), const),
        ],
        out_specs=pl.BlockSpec((tile_b, C_out), lambda i: (i, 0)),
        compiler_params=pltpu.CompilerParams(
            dimension_semantics=("parallel",)),
    )(x_p, w1_p, w2_p, w3_p, b1_p, b2_p, b3_p)

    return out[:B, :]


def init_params(key, in_channels, hidden_channels, out_channels):
    """Deterministic init mimicking PyTorch nn.Linear default (U[-1/sqrt(fan_in), 1/sqrt(fan_in)])."""
    ks = jax.random.split(key, 6)

    def lin(kw, kb, fan_in, fan_out):
        bound = 1.0 / jnp.sqrt(fan_in)
        w = jax.random.uniform(kw, (fan_in, fan_out), jnp.float32, -bound, bound)
        b = jax.random.uniform(kb, (1, fan_out), jnp.float32, -bound, bound)
        return w, b

    w1, b1 = lin(ks[0], ks[1], in_channels, hidden_channels)
    w2, b2 = lin(ks[2], ks[3], hidden_channels, hidden_channels)
    w3, b3 = lin(ks[4], ks[5], hidden_channels, out_channels)
    return {"w1": w1, "b1": b1, "w2": w2, "b2": b2, "w3": w3, "b3": b3}


def reference_forward(x, p):
    h1 = jnp.maximum(x @ p["w1"] + p["b1"], 0.0)
    h2 = jnp.maximum(h1 @ p["w2"] + p["b2"], 0.0)
    return h2 @ p["w3"] + p["b3"]


if __name__ == "__main__":
    # Shapes consistent with the module: 37 input features (data.iloc[:, 2:39]),
    # hidden=32, binary-label output=2.
    batch, in_channels, hidden_channels, out_channels = 8, 37, 32, 2

    key = jax.random.PRNGKey(0)
    k_x, k_p = jax.random.split(key)
    x = jax.random.normal(k_x, (batch, in_channels), jnp.float32)
    params = init_params(k_p, in_channels, hidden_channels, out_channels)

    # f32 compute at small batch keeps the check tight; pass
    # compute_dtype=jnp.bfloat16 for large-batch MXU-native throughput.
    out = discriminator_forward(x, params)
    out = jax.block_until_ready(out)

    ref = reference_forward(x, params)
    assert out.shape == (batch, out_channels)
    assert jnp.allclose(out, ref, atol=1e-5, rtol=1e-5), "mismatch vs JAX reference"

    print("KERNEL_OK")
</pallas_src>

<mosaic_0001>
module attributes {stable_mosaic.version = 11 : i64} {
  func.func @kernel(%arg0: i32, %arg1: memref<8x37xf32, #tpu.memory_space<vmem>>, %arg2: memref<37x128xf32, #tpu.memory_space<vmem>>, %arg3: memref<128x128xf32, #tpu.memory_space<vmem>>, %arg4: memref<128x2xf32, #tpu.memory_space<vmem>>, %arg5: memref<1x128xf32, #tpu.memory_space<vmem>>, %arg6: memref<1x128xf32, #tpu.memory_space<vmem>>, %arg7: memref<1x2xf32, #tpu.memory_space<vmem>>, %arg8: memref<8x2xf32, #tpu.memory_space<vmem>>) attributes {dimension_semantics = [#tpu.dimension_semantics<parallel>], iteration_bounds = array<i64: 1>, scalar_prefetch = 0 : i64, scratch_operands = 0 : i64, tpu.core_type = #tpu.core_type<tc>, window_params = [{transform_indices = @transform_0, window_bounds = array<i64: 8, 37>}, {pipeline_mode = #tpu.pipeline_mode<synchronous>, transform_indices = @transform_1, window_bounds = array<i64: 37, 128>}, {pipeline_mode = #tpu.pipeline_mode<synchronous>, transform_indices = @transform_2, window_bounds = array<i64: 128, 128>}, {pipeline_mode = #tpu.pipeline_mode<synchronous>, transform_indices = @transform_3, window_bounds = array<i64: 128, 2>}, {pipeline_mode = #tpu.pipeline_mode<synchronous>, transform_indices = @transform_4, window_bounds = array<i64: 1, 128>}, {pipeline_mode = #tpu.pipeline_mode<synchronous>, transform_indices = @transform_5, window_bounds = array<i64: 1, 128>}, {pipeline_mode = #tpu.pipeline_mode<synchronous>, transform_indices = @transform_6, window_bounds = array<i64: 1, 2>}, {transform_indices = @transform_7, window_bounds = array<i64: 8, 2>}]} {
    %c0 = arith.constant 0 : index
    %c0_0 = arith.constant 0 : index
    %0 = vector.load %arg1[%c0, %c0_0] : memref<8x37xf32, #tpu.memory_space<vmem>>, vector<8x37xf32>
    %c0_1 = arith.constant 0 : index
    %c0_2 = arith.constant 0 : index
    %1 = vector.load %arg2[%c0_1, %c0_2] : memref<37x128xf32, #tpu.memory_space<vmem>>, vector<37x128xf32>
    %cst = arith.constant dense<0.000000e+00> : vector<8x128xf32>
    %2 = tpu.matmul %0, %1, %cst {dimension_numbers = #tpu.dot_dimension_numbers<[1], [0], [0], [1], [0, 0, 1, 1], [], []>} : vector<8x37xf32>, vector<37x128xf32>, vector<8x128xf32> -> vector<8x128xf32>
    %c0_3 = arith.constant 0 : index
    %c0_4 = arith.constant 0 : index
    %3 = vector.load %arg5[%c0_3, %c0_4] : memref<1x128xf32, #tpu.memory_space<vmem>>, vector<1x128xf32>
    %4 = vector.broadcast %3 : vector<1x128xf32> to vector<8x128xf32>
    %5 = arith.addf %2, %4 : vector<8x128xf32>
    %cst_5 = arith.constant 0.000000e+00 : f32
    %6 = vector.broadcast %cst_5 : f32 to vector<8x128xf32>
    %7 = arith.maximumf %5, %6 : vector<8x128xf32>
    %c0_6 = arith.constant 0 : index
    %c0_7 = arith.constant 0 : index
    %8 = vector.load %arg3[%c0_6, %c0_7] : memref<128x128xf32, #tpu.memory_space<vmem>>, vector<128x128xf32>
    %cst_8 = arith.constant dense<0.000000e+00> : vector<8x128xf32>
    %9 = tpu.matmul %7, %8, %cst_8 {dimension_numbers = #tpu.dot_dimension_numbers<[1], [0], [0], [1], [0, 0, 1, 1], [], []>} : vector<8x128xf32>, vector<128x128xf32>, vector<8x128xf32> -> vector<8x128xf32>
    %c0_9 = arith.constant 0 : index
    %c0_10 = arith.constant 0 : index
    %10 = vector.load %arg6[%c0_9, %c0_10] : memref<1x128xf32, #tpu.memory_space<vmem>>, vector<1x128xf32>
    %11 = vector.broadcast %10 : vector<1x128xf32> to vector<8x128xf32>
    %12 = arith.addf %9, %11 : vector<8x128xf32>
    %cst_11 = arith.constant 0.000000e+00 : f32
    %13 = vector.broadcast %cst_11 : f32 to vector<8x128xf32>
    %14 = arith.maximumf %12, %13 : vector<8x128xf32>
    %c0_12 = arith.constant 0 : index
    %c0_13 = arith.constant 0 : index
    %15 = vector.load %arg4[%c0_12, %c0_13] : memref<128x2xf32, #tpu.memory_space<vmem>>, vector<128x2xf32>
    %cst_14 = arith.constant dense<0.000000e+00> : vector<8x2xf32>
    %16 = tpu.matmul %14, %15, %cst_14 {dimension_numbers = #tpu.dot_dimension_numbers<[1], [0], [0], [1], [0, 0, 1, 1], [], []>} : vector<8x128xf32>, vector<128x2xf32>, vector<8x2xf32> -> vector<8x2xf32>
    %c0_15 = arith.constant 0 : index
    %c0_16 = arith.constant 0 : index
    %17 = vector.load %arg7[%c0_15, %c0_16] : memref<1x2xf32, #tpu.memory_space<vmem>>, vector<1x2xf32>
    %18 = vector.broadcast %17 : vector<1x2xf32> to vector<8x2xf32>
    %19 = arith.addf %16, %18 : vector<8x2xf32>
    %c0_17 = arith.constant 0 : index
    %c0_18 = arith.constant 0 : index
    %20 = vector.load %arg8[%c0_17, %c0_18] : memref<8x2xf32, #tpu.memory_space<vmem>>, vector<8x2xf32>
    tpu.vector_store %arg8[%c0_17, %c0_18], %19 {strides = array<i32>} : memref<8x2xf32, #tpu.memory_space<vmem>>, vector<8x2xf32>,
    return
  }
  func.func @transform_0(%arg0: i32) -> (i32, i32) {
    %c0_i32 = arith.constant 0 : i32
    %c0_i32_0 = arith.constant 0 : i32
    return %arg0, %c0_i32 : i32, i32
  }
  func.func @transform_1(%arg0: i32) -> (i32, i32) {
    %c0_i32 = arith.constant 0 : i32
    %c0_i32_0 = arith.constant 0 : i32
    %c0_i32_1 = arith.constant 0 : i32
    return %c0_i32, %c0_i32_0 : i32, i32
  }
  func.func @transform_2(%arg0: i32) -> (i32, i32) {
    %c0_i32 = arith.constant 0 : i32
    %c0_i32_0 = arith.constant 0 : i32
    %c0_i32_1 = arith.constant 0 : i32
    return %c0_i32, %c0_i32_0 : i32, i32
  }
  func.func @transform_3(%arg0: i32) -> (i32, i32) {
    %c0_i32 = arith.constant 0 : i32
    %c0_i32_0 = arith.constant 0 : i32
    %c0_i32_1 = arith.constant 0 : i32
    return %c0_i32, %c0_i32_0 : i32, i32
  }
  func.func @transform_4(%arg0: i32) -> (i32, i32) {
    %c0_i32 = arith.constant 0 : i32
    %c0_i32_0 = arith.constant 0 : i32
    %c0_i32_1 = arith.constant 0 : i32
    return %c0_i32, %c0_i32_0 : i32, i32
  }
  func.func @transform_5(%arg0: i32) -> (i32, i32) {
    %c0_i32 = arith.constant 0 : i32
    %c0_i32_0 = arith.constant 0 : i32
    %c0_i32_1 = arith.constant 0 : i32
    return %c0_i32, %c0_i32_0 : i32, i32
  }
  func.func @transform_6(%arg0: i32) -> (i32, i32) {
    %c0_i32 = arith.constant 0 : i32
    %c0_i32_0 = arith.constant 0 : i32
    %c0_i32_1 = arith.constant 0 : i32
    return %c0_i32, %c0_i32_0 : i32, i32
  }
  func.func @transform_7(%arg0: i32) -> (i32, i32) {
    %c0_i32 = arith.constant 0 : i32
    %c0_i32_0 = arith.constant 0 : i32
    return %arg0, %c0_i32 : i32, i32
  }
}

</mosaic_0001>

<llo_original>
// kernel: tpu_custom_call.1
$region0: #{tpu_custom_call.1}
  #allocation0 [shape = 'u32[]', space=smem, size = 0x4, offset = 0x4, fixed_abs, tag = 'smem constant byte address 0x4 - core index']
  #allocation1 [shape = 'u32[72,128]{1,0:T(1,128)}', space=vmem, size = 0x9000, scoped, tag = 'internal scratch']
  %s0 = inlined_call_operand.hbm [shape: f32[8,37], index: 0, kind: input, shape index: {}]
  %s1 = inlined_call_operand.hbm [shape: f32[37,128], index: 1, kind: input, shape index: {}]
  %s2 = inlined_call_operand.vmem [shape: f32[128,128], index: 2, kind: input, shape index: {}]
  %s3 = inlined_call_operand.vmem [shape: f32[128,2], index: 3, kind: input, shape index: {}]
  %s4 = inlined_call_operand.vmem [shape: f32[1,128], index: 4, kind: input, shape index: {}]
  %s5 = inlined_call_operand.vmem [shape: f32[1,128], index: 5, kind: input, shape index: {}]
  %s6 = inlined_call_operand.vmem [shape: f32[1,2], index: 6, kind: input, shape index: {}]
  %s7 = inlined_call_operand.vmem [shape: f32[8,2], index: 7, kind: output, shape index: {}]
  %s8 = sld [smem:[#allocation0]]
  $region46: #{tpu_custom_call.1} parent=0
    _
  %s10 = ssub.s32 1, %s8
  %s11 = scalar_select 0, %s10, %s8
  $region1: #{tpu_custom_call.1} parent=0
    #allocation2 [shape = 'u8[4096]{0}', space=vmem, size = 0x1000, scoped, tag = 'input window, operand 0, single buffered']
    #allocation3 [shape = 's32[1]{0}', space=sflag, size = 0x4, scoped, tag = 'scoped memory for tpu_custom_call.1']
    #allocation4 [shape = 'u8[20480]{0}', space=vmem, size = 0x5000, scoped, tag = 'input window, operand 1, single buffered']
    #allocation5 [shape = 's32[1]{0}', space=sflag, size = 0x4, scoped, tag = 'scoped memory for tpu_custom_call.1']
    %12 = vsyncpa [#allocation3], 0
    %13 = vsyncpa [#allocation5], 0
    // Predicated region
    $region2: #{tpu_custom_call.1} parent=1 // pred_check
      _
    $region3: #{tpu_custom_call.1} parent=1 // pred_check_branch
      %15 = sbr.rel (0) target = $region5
    $region4: #{tpu_custom_call.1} parent=1 // pred_region
      %17 = vsyncadd [#allocation3], 0
      %s19 = sshll.u32 %s0, 4
      %s20 = int_to_ptr.hbm [resolvable:$true] %s19
      %s21 = sshll.u32 [#allocation2], 4
      %s22 = int_to_ptr.vmem [resolvable:$true] %s21
      %24 = dma.hbm_to_vmem [thread:$0]  %s20, 128, %s22, [#allocation3]
    $region5: #{tpu_custom_call.1} parent=1 // pred_fallthru
      _
    // Predicated region
    $region6: #{tpu_custom_call.1} parent=1 // pred_check
      _
    $region7: #{tpu_custom_call.1} parent=1 // pred_check_branch
      %26 = sbr.rel (0) target = $region9
    $region8: #{tpu_custom_call.1} parent=1 // pred_region
      %28 = vsyncadd [#allocation5], 0
      %s29 = sshll.u32 %s1, 4
      %s30 = int_to_ptr.hbm [resolvable:$true] %s29
      %s31 = sshll.u32 [#allocation4], 4
      %s32 = int_to_ptr.vmem [resolvable:$true] %s31
      %37 = dma.hbm_to_vmem [thread:$0]  %s30, 640, %s32, [#allocation5], 128, 128, 8
    $region9: #{tpu_custom_call.1} parent=1 // pred_fallthru
      _
    // Predicated region
    $region10: #{tpu_custom_call.1} parent=1 // pred_check
      _
    $region11: #{tpu_custom_call.1} parent=1 // pred_check_branch
      %39 = sbr.rel (0) target = $region13
    $region12: #{tpu_custom_call.1} parent=1 // pred_region
      _
    $region13: #{tpu_custom_call.1} parent=1 // pred_fallthru
      _
    // Predicated region
    $region14: #{tpu_custom_call.1} parent=1 // pred_check
      _
    $region15: #{tpu_custom_call.1} parent=1 // pred_check_branch
      %41 = sbr.rel (0) target = $region17
    $region16: #{tpu_custom_call.1} parent=1 // pred_region
      _
    $region17: #{tpu_custom_call.1} parent=1 // pred_fallthru
      _
    // Predicated region
    $region18: #{tpu_custom_call.1} parent=1 // pred_check
      _
    $region19: #{tpu_custom_call.1} parent=1 // pred_check_branch
      %43 = sbr.rel (0) target = $region21
    $region20: #{tpu_custom_call.1} parent=1 // pred_region
      _
    $region21: #{tpu_custom_call.1} parent=1 // pred_fallthru
      _
    // Predicated region
    $region22: #{tpu_custom_call.1} parent=1 // pred_check
      _
    $region23: #{tpu_custom_call.1} parent=1 // pred_check_branch
      %45 = sbr.rel (0) target = $region25
    $region24: #{tpu_custom_call.1} parent=1 // pred_region
      _
    $region25: #{tpu_custom_call.1} parent=1 // pred_fallthru
      _
    // Predicated region
    $region26: #{tpu_custom_call.1} parent=1 // pred_check
      _
    $region27: #{tpu_custom_call.1} parent=1 // pred_check_branch
      %47 = sbr.rel (0) target = $region29
    $region28: #{tpu_custom_call.1} parent=1 // pred_region
      _
    $region29: #{tpu_custom_call.1} parent=1 // pred_fallthru
      _
    // Predicated region
    $region30: #{tpu_custom_call.1} parent=1 // pred_check
      _
    $region31: #{tpu_custom_call.1} parent=1 // pred_check_branch
      %49 = sbr.rel (0) target = $region33
    $region32: #{tpu_custom_call.1} parent=1 // pred_region
      %51 = dma.done [#allocation3], 128
    $region33: #{tpu_custom_call.1} parent=1 // pred_fallthru
      _
    // Predicated region
    $region34: #{tpu_custom_call.1} parent=1 // pred_check
      _
    $region35: #{tpu_custom_call.1} parent=1 // pred_check_branch
      %53 = sbr.rel (0) target = $region37
    $region36: #{tpu_custom_call.1} parent=1 // pred_region
      %55 = dma.done [#allocation5], 640
    $region37: #{tpu_custom_call.1} parent=1 // pred_fallthru
      _
    %v56 = vld [vmem:[#allocation2] sm:$0xff]
    %v57 = vld [vmem:[#allocation4] sm:$0xff]
    %v58 = vld [vmem:[#allocation4 + $0x8] sm:$0xff]
    %v59 = vld [vmem:[#allocation4 + $0x10] sm:$0xff]
    %v60 = vld [vmem:[#allocation4 + $0x18] sm:$0xff]
    %v61 = vld [vmem:[#allocation4 + $0x20] sm:$0x1f]
    %v62 = vld [vmem:[%s4] sm:$0x1]
    %v64 = vperm.slane %v62, 0
    %vm66 = vcmask 302080
    %v68 = vsel %vm66, %v56, 0
    %vm70 = vcmask 1044480
    %v72 = vsel %vm70, %v61, 0
    %74 = vmatpush.msra.mxu0 0.0
    %75 = vmatpush.msra.mxu0 0.0
    %76 = vmatpush.msra.mxu0 0.0
    %77 = vmatpush.msra.mxu0 0.0
    %78 = vmatpush.msra.mxu0 0.0
    %79 = vmatpush.msra.mxu0 0.0
    %80 = vmatpush.msra.mxu0 0.0
    %81 = vmatpush.msra.mxu0 0.0
    %82 = vmatpush.msra.mxu0 0.0
    %83 = vmatpush.msra.mxu0 0.0
    %84 = vmatpush.msra.mxu0 0.0
    %85 = vmatpush.msra.mxu0 %v72
    %86 = vmatpush.msra.mxu0 %v60
    %87 = vmatpush.msra.mxu0 %v59
    %88 = vmatpush.msra.mxu0 %v58
    %89 = vmatpush.msra.mxu0 %v57
    %90 = vmatmul.f32.gmra.mxu0 %v68
    %v91 = vpop.f32.mrf.mxu0
    %v92 = vadd.f32 %v64, %v91
    %93 = vdwg.mxu0
    %v94 = vmax.f32 %v92, 0.0
    %v95 = vld [vmem:[%s2] sm:$0xff]
    %v96 = vld [vmem:[%s2 + $0x8] sm:$0xff]
    %v97 = vld [vmem:[%s2 + $0x10] sm:$0xff]
    %v98 = vld [vmem:[%s2 + $0x18] sm:$0xff]
    %v99 = vld [vmem:[%s2 + $0x20] sm:$0xff]
    %v100 = vld [vmem:[%s2 + $0x28] sm:$0xff]
    %v101 = vld [vmem:[%s2 + $0x30] sm:$0xff]
    %v102 = vld [vmem:[%s2 + $0x38] sm:$0xff]
    %v103 = vld [vmem:[%s2 + $0x40] sm:$0xff]
    %v104 = vld [vmem:[%s2 + $0x48] sm:$0xff]
    %v105 = vld [vmem:[%s2 + $0x50] sm:$0xff]
    %v106 = vld [vmem:[%s2 + $0x58] sm:$0xff]
    %v107 = vld [vmem:[%s2 + $0x60] sm:$0xff]
    %v108 = vld [vmem:[%s2 + $0x68] sm:$0xff]
    %v109 = vld [vmem:[%s2 + $0x70] sm:$0xff]
    %v110 = vld [vmem:[%s2 + $0x78] sm:$0xff]
    %v111 = vld [vmem:[%s5] sm:$0x1]
    %v113 = vperm.slane %v111, 0
    %115 = vmatpush.msra.mxu0 %v110
    %116 = vmatpush.msra.mxu0 %v109
    %117 = vmatpush.msra.mxu0 %v108
    %118 = vmatpush.msra.mxu0 %v107
    %119 = vmatpush.msra.mxu0 %v106
    %120 = vmatpush.msra.mxu0 %v105
    %121 = vmatpush.msra.mxu0 %v104
    %122 = vmatpush.msra.mxu0 %v103
    %123 = vmatpush.msra.mxu0 %v102
    %124 = vmatpush.msra.mxu0 %v101
    %125 = vmatpush.msra.mxu0 %v100
    %126 = vmatpush.msra.mxu0 %v99
    %127 = vmatpush.msra.mxu0 %v98
    %128 = vmatpush.msra.mxu0 %v97
    %129 = vmatpush.msra.mxu0 %v96
    %130 = vmatpush.msra.mxu0 %v95
    %131 = vmatmul.f32.gmra.mxu0 %v94
    %v132 = vpop.f32.mrf.mxu0
    %v133 = vadd.f32 %v113, %v132
    %134 = vdwg.mxu0
    %v135 = vmax.f32 %v133, 0.0
    %v136 = vld [vmem:[%s3] sm:$0xff]
    %v137 = vld [vmem:[%s3 + $0x8] sm:$0xff]
    %v138 = vld [vmem:[%s3 + $0x10] sm:$0xff]
    %v139 = vld [vmem:[%s3 + $0x18] sm:$0xff]
    %v140 = vld [vmem:[%s3 + $0x20] sm:$0xff]
    %v141 = vld [vmem:[%s3 + $0x28] sm:$0xff]
    %v142 = vld [vmem:[%s3 + $0x30] sm:$0xff]
    %v143 = vld [vmem:[%s3 + $0x38] sm:$0xff]
    %v144 = vld [vmem:[%s3 + $0x40] sm:$0xff]
    %v145 = vld [vmem:[%s3 + $0x48] sm:$0xff]
    %v146 = vld [vmem:[%s3 + $0x50] sm:$0xff]
    %v147 = vld [vmem:[%s3 + $0x58] sm:$0xff]
    %v148 = vld [vmem:[%s3 + $0x60] sm:$0xff]
    %v149 = vld [vmem:[%s3 + $0x68] sm:$0xff]
    %v150 = vld [vmem:[%s3 + $0x70] sm:$0xff]
    %v151 = vld [vmem:[%s3 + $0x78] sm:$0xff]
    %v152 = vld [vmem:[%s6] sm:$0x1]
    %v154 = vperm.slane %v152, 0
    %156 = vmatpush.msra.mxu0 %v151
    %157 = vmatpush.msra.mxu0 %v150
    %158 = vmatpush.msra.mxu0 %v149
    %159 = vmatpush.msra.mxu0 %v148
    %160 = vmatpush.msra.mxu0 %v147
    %161 = vmatpush.msra.mxu0 %v146
    %162 = vmatpush.msra.mxu0 %v145
    %163 = vmatpush.msra.mxu0 %v144
    %164 = vmatpush.msra.mxu0 %v143
    %165 = vmatpush.msra.mxu0 %v142
    %166 = vmatpush.msra.mxu0 %v141
    %167 = vmatpush.msra.mxu0 %v140
    %168 = vmatpush.msra.mxu0 %v139
    %169 = vmatpush.msra.mxu0 %v138
    %170 = vmatpush.msra.mxu0 %v137
    %171 = vmatpush.msra.mxu0 %v136
    %172 = vmatmul.f32.gmra.mxu0 %v135
    %v173 = vpop.f32.mrf.mxu0
    %v174 = vadd.f32 %v154, %v173
    %175 = vdwg.mxu0
    %vm176 = vcmask 15360
    %177 = vst.msk [vmem:[%s7] sm:$0xff] %vm176, %v174
    // Predicated region
    $region38: #{tpu_custom_call.1} parent=1 // pred_check
      _
    $region39: #{tpu_custom_call.1} parent=1 // pred_check_branch
      %179 = sbr.rel (0) target = $region41
    $region40: #{tpu_custom_call.1} parent=1 // pred_region
      _
    $region41: #{tpu_custom_call.1} parent=1 // pred_fallthru
      _
    // Predicated region
    $region42: #{tpu_custom_call.1} parent=1 // pred_check
      _
    $region43: #{tpu_custom_call.1} parent=1 // pred_check_branch
      %181 = sbr.rel (0) target = $region45
    $region44: #{tpu_custom_call.1} parent=1 // pred_region
      _
    $region45: #{tpu_custom_call.1} parent=1 // pred_fallthru
      _
    %182 = vsyncpa [#allocation3], 1
    %183 = vsyncpa [#allocation5], 1

</llo_original>
